<compile_context>
chip_gen: v7x
topology: tpu7x:2x2x1
jax: 0.10.0
libtpu: 0.0.40
codegen_flags: <defaults>
</compile_context>

<pallas_src>
import functools

import jax
import jax.numpy as jnp
from jax.experimental import pallas as pl
from jax.experimental.pallas import tpu as pltpu


def _fused_ce_kernel(n_valid, inv_n, tile_cols,
                     vt_logits_ref, v_logits_ref, t_logits_ref, labels_ref,
                     out_ref, acc_ref):
    """Lane-dense fused 3-task CE.  Samples on lanes, classes on sublanes.

    acc_ref is a (1, tile_cols) f32 VMEM per-sample partial-sum accumulator that
    stays resident across the grid; the scalar reduce + 1/N scale happen once at
    the final grid step.
    """
    i = pl.program_id(0)

    @pl.when(i == 0)
    def _():
        acc_ref[...] = jnp.zeros_like(acc_ref)

    # Columns (samples) beyond the true batch size (ragged last tile) contribute 0.
    col_ids = i * tile_cols + jax.lax.broadcasted_iota(jnp.int32, (1, tile_cols), 1)
    col_valid = col_ids < n_valid                                       # (1, T) bool

    labels_all = labels_ref[...]                                        # (3, T) int32

    def ce_per_sample(logits_ref, task_idx):
        logits = logits_ref[...].astype(jnp.float32)                    # (C, T)
        c = logits.shape[0]
        lab = labels_all[task_idx:task_idx + 1, :]                      # (1, T)

        # Numerically stable log-sum-exp over the (sublane) class axis; reuse the
        # shifted logits for the label pick.
        col_max = jnp.max(logits, axis=0, keepdims=True)                # (1, T)
        shifted = logits - col_max                                      # (C, T)
        lse = jnp.log(jnp.sum(jnp.exp(shifted), axis=0, keepdims=True))  # (1, T)

        class_ids = jax.lax.broadcasted_iota(jnp.int32, (c, tile_cols), 0)
        label_shifted = jnp.sum(
            jnp.where(class_ids == lab, shifted, 0.0), axis=0, keepdims=True)  # (1, T)

        return lse - label_shifted                                      # (1, T)

    per_sample = (ce_per_sample(vt_logits_ref, 0)
                  + ce_per_sample(v_logits_ref, 1)
                  + ce_per_sample(t_logits_ref, 2))

    # Keep the where-select (not multiplicative masking): garbage columns in the
    # ragged last block may hold Inf/NaN.
    acc_ref[...] += jnp.where(col_valid, per_sample, 0.0)

    @pl.when(i == pl.num_programs(0) - 1)
    def _():
        # mean over N for each task, then summed over the 3 tasks == total_sum / N.
        out_ref[0, 0] = jnp.sum(acc_ref[...]) * inv_n


def multi_task_loss_three_tasks(verb_preds, target_preds, verbtarget_preds,
                                verb_labels, target_labels, verbtarget_labels,
                                *, tile_n=4096):
    """Fused 3-task cross-entropy loss (mean reduction each, summed).

    Inputs match the PyTorch forward: (N, C_i) logits and (N,) integer labels.
    """
    n = verb_preds.shape[0]
    c_v = verb_preds.shape[1]
    c_t = target_preds.shape[1]
    c_vt = verbtarget_preds.shape[1]

    if n == 0:
        # PyTorch's mean-reduction CE over an empty batch is NaN.
        return jnp.float32(jnp.nan)

    # Lane-dense layout: samples on the 128-lane axis, classes on sublanes.
    vt_lT = verbtarget_preds.T                                   # (C_vt, N)
    v_lT = verb_preds.T                                          # (C_v,  N)
    t_lT = target_preds.T                                        # (C_t,  N)
    labels_all = jnp.stack([verbtarget_labels.astype(jnp.int32),
                            verb_labels.astype(jnp.int32),
                            target_labels.astype(jnp.int32)], axis=0)  # (3, N)

    # VMEM-budgeted tile along N (lanes).  Budget keeps the double-buffered input
    # streams well under v5e's 16 MiB scoped default and v7x's 64 MiB physical VMEM.
    logit_bytes = jnp.dtype(verbtarget_preds.dtype).itemsize
    bytes_per_col = (c_vt + c_v + c_t) * logit_bytes + 3 * 4
    stream_budget = 8 << 20
    cap = max(128, min(int(tile_n), stream_budget // (2 * bytes_per_col)))
    if n <= cap:
        tile = n                          # single full-extent block (any N allowed)
    else:
        tile = (cap // 128) * 128         # lane-aligned tile; ragged last block masked

    grid = (pl.cdiv(n, tile),)

    vmem_need = 2 * tile * bytes_per_col + 8 * tile * 4 + (1 << 16)
    vmem_limit = int(max(4 << 20, min(32 << 20, 2 * vmem_need)))

    kernel = functools.partial(_fused_ce_kernel, n, 1.0 / float(n), tile)

    out = pl.pallas_call(
        kernel,
        out_shape=jax.ShapeDtypeStruct((1, 1), jnp.float32),
        grid=grid,
        in_specs=[
            pl.BlockSpec((c_vt, tile), lambda i: (0, i)),   # verbtarget logits (C, N)
            pl.BlockSpec((c_v, tile), lambda i: (0, i)),    # verb logits       (C, N)
            pl.BlockSpec((c_t, tile), lambda i: (0, i)),    # target logits     (C, N)
            pl.BlockSpec((3, tile), lambda i: (0, i)),      # stacked labels    (3, N)
        ],
        out_specs=pl.BlockSpec((1, 1), lambda i: (0, 0), memory_space=pltpu.SMEM),
        scratch_shapes=[pltpu.VMEM((1, tile), jnp.float32)],
        compiler_params=pltpu.CompilerParams(
            dimension_semantics=("arbitrary",),
            vmem_limit_bytes=vmem_limit),
    )(vt_lT, v_lT, t_lT, labels_all)

    return out[0, 0]


if __name__ == "__main__":
    # Small synthetic shapes consistent with the module's forward:
    #   verb_preds: (N, C_verb), target_preds: (N, C_target),
    #   verbtarget_preds: (N, C_verbtarget), labels: (N,) int.
    C_VERB, C_TARGET, C_VERBTARGET = 10, 15, 56

    key = jax.random.PRNGKey(0)

    def ref_loss(vp, tp, vtp, vl, tl, vtl):
        def ref_ce(logits, labels):
            ls = jax.nn.log_softmax(logits.astype(jnp.float32), axis=-1)
            return -jnp.mean(ls[jnp.arange(logits.shape[0]), labels])
        return ref_ce(vtp, vtl) + ref_ce(vp, vl) + ref_ce(tp, tl)

    loss_fn = jax.jit(multi_task_loss_three_tasks, static_argnames=("tile_n",))

    # (a) N=20, default tile -> single full-extent block path.
    # (b) N=300, tile_n=128 -> multi-step resident accumulator + ragged-tile mask.
    for (N, tile_n) in [(20, 4096), (300, 128)]:
        keys = jax.random.split(jax.random.fold_in(key, N), 6)
        verb_preds = jax.random.normal(keys[0], (N, C_VERB), dtype=jnp.float32)
        target_preds = jax.random.normal(keys[1], (N, C_TARGET), dtype=jnp.float32)
        verbtarget_preds = jax.random.normal(keys[2], (N, C_VERBTARGET), dtype=jnp.float32)
        verb_labels = jax.random.randint(keys[3], (N,), 0, C_VERB, dtype=jnp.int32)
        target_labels = jax.random.randint(keys[4], (N,), 0, C_TARGET, dtype=jnp.int32)
        verbtarget_labels = jax.random.randint(keys[5], (N,), 0, C_VERBTARGET, dtype=jnp.int32)

        loss = loss_fn(verb_preds, target_preds, verbtarget_preds,
                       verb_labels, target_labels, verbtarget_labels, tile_n=tile_n)
        jax.block_until_ready(loss)

        ref = ref_loss(verb_preds, target_preds, verbtarget_preds,
                       verb_labels, target_labels, verbtarget_labels)
        assert jnp.allclose(loss, ref, rtol=1e-5, atol=1e-5), (N, tile_n, loss, ref)

    print("KERNEL_OK")
</pallas_src>

<mosaic_0001>
module attributes {stable_mosaic.version = 11 : i64} {
  func.func @_fused_ce_kernel(%arg0: i32, %arg1: memref<56x20xf32, #tpu.memory_space<vmem>>, %arg2: memref<10x20xf32, #tpu.memory_space<vmem>>, %arg3: memref<15x20xf32, #tpu.memory_space<vmem>>, %arg4: memref<3x20xi32, #tpu.memory_space<vmem>>, %arg5: memref<1x1xf32, #tpu.memory_space<smem>>, %arg6: memref<1x20xf32, #tpu.memory_space<vmem>>) attributes {dimension_semantics = [#tpu.dimension_semantics<arbitrary>], iteration_bounds = array<i64: 1>, scalar_prefetch = 0 : i64, scratch_operands = 1 : i64, tpu.core_type = #tpu.core_type<tc>, window_params = [{transform_indices = @transform_0, window_bounds = array<i64: 56, 20>}, {transform_indices = @transform_1, window_bounds = array<i64: 10, 20>}, {transform_indices = @transform_2, window_bounds = array<i64: 15, 20>}, {transform_indices = @transform_3, window_bounds = array<i64: 3, 20>}, {transform_indices = @transform_4, window_bounds = array<i64: 1, 1>}]} {
    %c0_i32 = arith.constant 0 : i32
    %0 = arith.cmpi eq, %arg0, %c0_i32 : i32
    %1 = arith.extui %0 : i1 to i32
    %c0_i32_0 = arith.constant 0 : i32
    %2 = arith.cmpi ne, %1, %c0_i32_0 : i32
    scf.if %2 {
      %cst_27 = arith.constant 0.000000e+00 : f32
      %74 = vector.broadcast %cst_27 : f32 to vector<1x20xf32>
      %c0_28 = arith.constant 0 : index
      %c0_29 = arith.constant 0 : index
      %75 = vector.load %arg6[%c0_28, %c0_29] : memref<1x20xf32, #tpu.memory_space<vmem>>, vector<1x20xf32>
      tpu.vector_store %arg6[%c0_28, %c0_29], %74 {strides = array<i32>} : memref<1x20xf32, #tpu.memory_space<vmem>>, vector<1x20xf32>,
    } else {
    }
    %c20_i32 = arith.constant 20 : i32
    %3 = arith.muli %arg0, %c20_i32 : i32
    %4 = tpu.iota {dimensions = array<i32: 1>} : vector<1x20xi32>
    %5 = vector.broadcast %3 : i32 to vector<1x20xi32>
    %6 = arith.addi %5, %4 : vector<1x20xi32>
    %c20_i32_1 = arith.constant 20 : i32
    %7 = vector.broadcast %c20_i32_1 : i32 to vector<1x20xi32>
    %8 = arith.cmpi slt, %6, %7 : vector<1x20xi32>
    %c0 = arith.constant 0 : index
    %c0_2 = arith.constant 0 : index
    %9 = vector.load %arg4[%c0, %c0_2] : memref<3x20xi32, #tpu.memory_space<vmem>>, vector<3x20xi32>
    %c0_3 = arith.constant 0 : index
    %c0_4 = arith.constant 0 : index
    %10 = vector.load %arg1[%c0_3, %c0_4] : memref<56x20xf32, #tpu.memory_space<vmem>>, vector<56x20xf32>
    %11 = vector.extract_strided_slice %9 {offsets = [0, 0], sizes = [1, 20], strides = [1, 1]} : vector<3x20xi32> to vector<1x20xi32>
    %cst = arith.constant dense<0xFF800000> : vector<20xf32>
    %12 = vector.multi_reduction <maximumf>, %10, %cst [0] : vector<56x20xf32> to vector<20xf32>
    %13 = vector.shape_cast %12 : vector<20xf32> to vector<1x20xf32>
    %14 = vector.broadcast %13 : vector<1x20xf32> to vector<56x20xf32>
    %15 = arith.subf %10, %14 : vector<56x20xf32>
    %16 = math.exp %15 : vector<56x20xf32>
    %cst_5 = arith.constant dense<0.000000e+00> : vector<20xf32>
    %17 = vector.multi_reduction <add>, %16, %cst_5 [0] : vector<56x20xf32> to vector<20xf32>
    %18 = vector.shape_cast %17 : vector<20xf32> to vector<1x20xf32>
    %19 = math.log %18 : vector<1x20xf32>
    %20 = tpu.iota {dimensions = array<i32: 0>} : vector<56x20xi32>
    %21 = vector.broadcast %11 : vector<1x20xi32> to vector<56x20xi32>
    %22 = arith.cmpi eq, %20, %21 : vector<56x20xi32>
    %cst_6 = arith.constant 0.000000e+00 : f32
    %23 = vector.broadcast %cst_6 : f32 to vector<56x20xf32>
    %24 = arith.select %22, %15, %23 : vector<56x20xi1>, vector<56x20xf32>
    %cst_7 = arith.constant dense<0.000000e+00> : vector<20xf32>
    %25 = vector.multi_reduction <add>, %24, %cst_7 [0] : vector<56x20xf32> to vector<20xf32>
    %26 = vector.shape_cast %25 : vector<20xf32> to vector<1x20xf32>
    %27 = arith.subf %19, %26 : vector<1x20xf32>
    %c0_8 = arith.constant 0 : index
    %c0_9 = arith.constant 0 : index
    %28 = vector.load %arg2[%c0_8, %c0_9] : memref<10x20xf32, #tpu.memory_space<vmem>>, vector<10x20xf32>
    %29 = vector.extract_strided_slice %9 {offsets = [1, 0], sizes = [1, 20], strides = [1, 1]} : vector<3x20xi32> to vector<1x20xi32>
    %cst_10 = arith.constant dense<0xFF800000> : vector<20xf32>
    %30 = vector.multi_reduction <maximumf>, %28, %cst_10 [0] : vector<10x20xf32> to vector<20xf32>
    %31 = vector.shape_cast %30 : vector<20xf32> to vector<1x20xf32>
    %32 = vector.broadcast %31 : vector<1x20xf32> to vector<10x20xf32>
    %33 = arith.subf %28, %32 : vector<10x20xf32>
    %34 = math.exp %33 : vector<10x20xf32>
    %cst_11 = arith.constant dense<0.000000e+00> : vector<20xf32>
    %35 = vector.multi_reduction <add>, %34, %cst_11 [0] : vector<10x20xf32> to vector<20xf32>
    %36 = vector.shape_cast %35 : vector<20xf32> to vector<1x20xf32>
    %37 = math.log %36 : vector<1x20xf32>
    %38 = tpu.iota {dimensions = array<i32: 0>} : vector<10x20xi32>
    %39 = vector.broadcast %29 : vector<1x20xi32> to vector<10x20xi32>
    %40 = arith.cmpi eq, %38, %39 : vector<10x20xi32>
    %cst_12 = arith.constant 0.000000e+00 : f32
    %41 = vector.broadcast %cst_12 : f32 to vector<10x20xf32>
    %42 = arith.select %40, %33, %41 : vector<10x20xi1>, vector<10x20xf32>
    %cst_13 = arith.constant dense<0.000000e+00> : vector<20xf32>
    %43 = vector.multi_reduction <add>, %42, %cst_13 [0] : vector<10x20xf32> to vector<20xf32>
    %44 = vector.shape_cast %43 : vector<20xf32> to vector<1x20xf32>
    %45 = arith.subf %37, %44 : vector<1x20xf32>
    %46 = arith.addf %27, %45 : vector<1x20xf32>
    %c0_14 = arith.constant 0 : index
    %c0_15 = arith.constant 0 : index
    %47 = vector.load %arg3[%c0_14, %c0_15] : memref<15x20xf32, #tpu.memory_space<vmem>>, vector<15x20xf32>
    %48 = vector.extract_strided_slice %9 {offsets = [2, 0], sizes = [1, 20], strides = [1, 1]} : vector<3x20xi32> to vector<1x20xi32>
    %cst_16 = arith.constant dense<0xFF800000> : vector<20xf32>
    %49 = vector.multi_reduction <maximumf>, %47, %cst_16 [0] : vector<15x20xf32> to vector<20xf32>
    %50 = vector.shape_cast %49 : vector<20xf32> to vector<1x20xf32>
    %51 = vector.broadcast %50 : vector<1x20xf32> to vector<15x20xf32>
    %52 = arith.subf %47, %51 : vector<15x20xf32>
    %53 = math.exp %52 : vector<15x20xf32>
    %cst_17 = arith.constant dense<0.000000e+00> : vector<20xf32>
    %54 = vector.multi_reduction <add>, %53, %cst_17 [0] : vector<15x20xf32> to vector<20xf32>
    %55 = vector.shape_cast %54 : vector<20xf32> to vector<1x20xf32>
    %56 = math.log %55 : vector<1x20xf32>
    %57 = tpu.iota {dimensions = array<i32: 0>} : vector<15x20xi32>
    %58 = vector.broadcast %48 : vector<1x20xi32> to vector<15x20xi32>
    %59 = arith.cmpi eq, %57, %58 : vector<15x20xi32>
    %cst_18 = arith.constant 0.000000e+00 : f32
    %60 = vector.broadcast %cst_18 : f32 to vector<15x20xf32>
    %61 = arith.select %59, %52, %60 : vector<15x20xi1>, vector<15x20xf32>
    %cst_19 = arith.constant dense<0.000000e+00> : vector<20xf32>
    %62 = vector.multi_reduction <add>, %61, %cst_19 [0] : vector<15x20xf32> to vector<20xf32>
    %63 = vector.shape_cast %62 : vector<20xf32> to vector<1x20xf32>
    %64 = arith.subf %56, %63 : vector<1x20xf32>
    %65 = arith.addf %46, %64 : vector<1x20xf32>
    %c0_20 = arith.constant 0 : index
    %c0_21 = arith.constant 0 : index
    %66 = vector.load %arg6[%c0_20, %c0_21] : memref<1x20xf32, #tpu.memory_space<vmem>>, vector<1x20xf32>
    %cst_22 = arith.constant 0.000000e+00 : f32
    %67 = vector.broadcast %cst_22 : f32 to vector<1x20xf32>
    %68 = arith.select %8, %65, %67 : vector<1x20xi1>, vector<1x20xf32>
    %69 = arith.addf %66, %68 : vector<1x20xf32>
    %c0_23 = arith.constant 0 : index
    %c0_24 = arith.constant 0 : index
    %70 = vector.load %arg6[%c0_23, %c0_24] : memref<1x20xf32, #tpu.memory_space<vmem>>, vector<1x20xf32>
    tpu.vector_store %arg6[%c0_23, %c0_24], %69 {strides = array<i32>} : memref<1x20xf32, #tpu.memory_space<vmem>>, vector<1x20xf32>,
    %c0_i32_25 = arith.constant 0 : i32
    %71 = arith.cmpi eq, %arg0, %c0_i32_25 : i32
    %72 = arith.extui %71 : i1 to i32
    %c0_i32_26 = arith.constant 0 : i32
    %73 = arith.cmpi ne, %72, %c0_i32_26 : i32
    scf.if %73 {
      %c0_27 = arith.constant 0 : index
      %c0_28 = arith.constant 0 : index
      %74 = vector.load %arg6[%c0_27, %c0_28] : memref<1x20xf32, #tpu.memory_space<vmem>>, vector<1x20xf32>
      %75 = vector.shape_cast %74 : vector<1x20xf32> to vector<1x1x20xf32>
      %cst_29 = arith.constant dense<0.000000e+00> : vector<1xf32>
      %76 = vector.multi_reduction <add>, %75, %cst_29 [1, 2] : vector<1x1x20xf32> to vector<1xf32>
      %77 = vector.shape_cast %76 : vector<1xf32> to vector<1x1x1xf32>
      %78 = vector.extract %77[0, 0, 0] : f32 from vector<1x1x1xf32>
      %cst_30 = arith.constant 5.000000e-02 : f32
      %79 = arith.mulf %78, %cst_30 : f32
      %c0_31 = arith.constant 0 : index
      %c0_32 = arith.constant 0 : index
      %80 = memref.load %arg5[%c0_31, %c0_32] : memref<1x1xf32, #tpu.memory_space<smem>>
      memref.store %79, %arg5[%c0_31, %c0_32] : memref<1x1xf32, #tpu.memory_space<smem>>
    } else {
    }
    return
  }
  func.func @transform_0(%arg0: i32) -> (i32, i32) {
    %c0_i32 = arith.constant 0 : i32
    %c0_i32_0 = arith.constant 0 : i32
    return %c0_i32, %arg0 : i32, i32
  }
  func.func @transform_1(%arg0: i32) -> (i32, i32) {
    %c0_i32 = arith.constant 0 : i32
    %c0_i32_0 = arith.constant 0 : i32
    return %c0_i32, %arg0 : i32, i32
  }
  func.func @transform_2(%arg0: i32) -> (i32, i32) {
    %c0_i32 = arith.constant 0 : i32
    %c0_i32_0 = arith.constant 0 : i32
    return %c0_i32, %arg0 : i32, i32
  }
  func.func @transform_3(%arg0: i32) -> (i32, i32) {
    %c0_i32 = arith.constant 0 : i32
    %c0_i32_0 = arith.constant 0 : i32
    return %c0_i32, %arg0 : i32, i32
  }
  func.func @transform_4(%arg0: i32) -> (i32, i32) {
    %c0_i32 = arith.constant 0 : i32
    %c0_i32_0 = arith.constant 0 : i32
    %c0_i32_1 = arith.constant 0 : i32
    return %c0_i32, %c0_i32_0 : i32, i32
  }
}

</mosaic_0001>

<llo_original>
// kernel: multi_task_loss_three_tasks.1
$region0: #{multi_task_loss_three_tasks.1}
  #allocation0 [shape = 'u32[]', space=smem, size = 0x4, offset = 0x4, fixed_abs, tag = 'smem constant byte address 0x4 - core index']
  #allocation1 [shape = 'u32[144,128]{1,0:T(1,128)}', space=vmem, size = 0x12000, scoped, tag = 'internal scratch']
  #allocation2 [shape = 'f32[1,20]{1,0:T(1,128)}', space=vmem, size = 0x200, scoped, tag = 'scratch operand']
  %s0 = inlined_call_operand.vmem [shape: f32[56,20], index: 0, kind: input, shape index: {}]
  %s1 = inlined_call_operand.vmem [shape: f32[10,20], index: 1, kind: input, shape index: {}]
  %s2 = inlined_call_operand.vmem [shape: f32[15,20], index: 2, kind: input, shape index: {}]
  %s3 = inlined_call_operand.vmem [shape: s32[3,20], index: 3, kind: input, shape index: {}]
  %s4 = inlined_call_operand.hbm [shape: f32[1,1], index: 4, kind: output, shape index: {}]
  %s5 = sld [smem:[#allocation0]]
  $region34: #{multi_task_loss_three_tasks.1} parent=0
    _
  %s7 = ssub.s32 1, %s5
  %s8 = scalar_select 0, %s7, %s5
  $region1: #{multi_task_loss_three_tasks.1} parent=0
    #allocation3 [shape = 'u8[512]{0}', space=smem, size = 0x200, scoped, tag = 'output window, operand 0, single buffered']
    #allocation4 [shape = 's32[1]{0}', space=sflag, size = 0x4, scoped, tag = 'scoped memory for multi_task_loss_three_tasks.1']
    %9 = vsyncpa [#allocation4], 0
    // Predicated region
    $region2: #{multi_task_loss_three_tasks.1} parent=1 // pred_check
      _
    $region3: #{multi_task_loss_three_tasks.1} parent=1 // pred_check_branch
      %11 = sbr.rel (0) target = $region5
    $region4: #{multi_task_loss_three_tasks.1} parent=1 // pred_region
      _
    $region5: #{multi_task_loss_three_tasks.1} parent=1 // pred_fallthru
      _
    // Predicated region
    $region6: #{multi_task_loss_three_tasks.1} parent=1 // pred_check
      _
    $region7: #{multi_task_loss_three_tasks.1} parent=1 // pred_check_branch
      %13 = sbr.rel (0) target = $region9
    $region8: #{multi_task_loss_three_tasks.1} parent=1 // pred_region
      _
    $region9: #{multi_task_loss_three_tasks.1} parent=1 // pred_fallthru
      _
    // Predicated region
    $region10: #{multi_task_loss_three_tasks.1} parent=1 // pred_check
      _
    $region11: #{multi_task_loss_three_tasks.1} parent=1 // pred_check_branch
      %15 = sbr.rel (0) target = $region13
    $region12: #{multi_task_loss_three_tasks.1} parent=1 // pred_region
      _
    $region13: #{multi_task_loss_three_tasks.1} parent=1 // pred_fallthru
      _
    // Predicated region
    $region14: #{multi_task_loss_three_tasks.1} parent=1 // pred_check
      _
    $region15: #{multi_task_loss_three_tasks.1} parent=1 // pred_check_branch
      %17 = sbr.rel (0) target = $region17
    $region16: #{multi_task_loss_three_tasks.1} parent=1 // pred_region
      _
    $region17: #{multi_task_loss_three_tasks.1} parent=1 // pred_fallthru
      _
    %p18 = scmp.eq.s32.totalorder 0, 0
    // Predicated region
    $region18: #{multi_task_loss_three_tasks.1} parent=1 // pred_check
      %p19 = pneg %p18
    $region19: #{multi_task_loss_three_tasks.1} parent=1 // pred_check_branch
      %21 = sbr.rel (%p19) target = $region21
    $region20: #{multi_task_loss_three_tasks.1} parent=1 // pred_region
      %vm22 = vcmask 155648
      %23 = vst.msk [vmem:[#allocation2] sm:$0x1] %vm22, 0.0
    $region21: #{multi_task_loss_three_tasks.1} parent=1 // pred_fallthru
      _
    %s24 = smul.u32 0, 20
    %v25 = vlaneseq
    %v26 = vand.u32 %v25, 127
    %v27 = vstv %s24
    %v28 = vadd.s32 %v27, %v26
    %vm29 = vcmp.lt.s32.totalorder %v28, 20
    %v30 = vld [vmem:[%s3] sm:$0x7]
    %v31 = vld [vmem:[%s0] sm:$0xff]
    %v32 = vld [vmem:[%s0 + $0x8] sm:$0xff]
    %v33 = vld [vmem:[%s0 + $0x10] sm:$0xff]
    %v34 = vld [vmem:[%s0 + $0x18] sm:$0xff]
    %v35 = vld [vmem:[%s0 + $0x20] sm:$0xff]
    %v36 = vld [vmem:[%s0 + $0x28] sm:$0xff]
    %v37 = vld [vmem:[%s0 + $0x30] sm:$0xff]
    %vm38 = vcmask 162816
    %v39 = vsel %vm38, %v31, -inf
    %v40 = vsel %vm38, %v32, -inf
    %v41 = vsel %vm38, %v33, -inf
    %v42 = vsel %vm38, %v34, -inf
    %v43 = vsel %vm38, %v35, -inf
    %v44 = vmax.f32 %v39, %v43
    %v45 = vsel %vm38, %v36, -inf
    %v46 = vmax.f32 %v40, %v45
    %v47 = vsel %vm38, %v37, -inf
    %v48 = vmax.f32 %v41, %v47
    %v49 = vmax.f32 %v44, %v46
    %v50 = vmax.f32 %v48, %v42
    %v51 = vmax.f32 %v49, %v50
    %v52 = vrot.slane %v51, 4
    %v53 = vmax.f32 %v51, %v52
    %v54 = vrot.slane %v53, 2
    %v55 = vmax.f32 %v53, %v54
    %v56 = vrot.slane %v55, 1
    %v57 = vmax.f32 %v55, %v56
    %v58 = vsub.f32 %v31, %v57
    %v59 = vsub.f32 %v32, %v57
    %v60 = vsub.f32 %v33, %v57
    %v61 = vsub.f32 %v34, %v57
    %v62 = vsub.f32 %v35, %v57
    %v63 = vsub.f32 %v36, %v57
    %v64 = vsub.f32 %v37, %v57
    %v65 = vmul.f32 %v58, 1.442695
    %v66 = vpow.pop %v65
    %v67 = vmul.f32 %v59, 1.442695
    %v68 = vpow.pop %v67
    %v69 = vmul.f32 %v60, 1.442695
    %v70 = vpow.pop %v69
    %v71 = vmul.f32 %v61, 1.442695
    %v72 = vpow.pop %v71
    %v73 = vmul.f32 %v62, 1.442695
    %v74 = vpow.pop %v73
    %v75 = vmul.f32 %v63, 1.442695
    %v76 = vpow.pop %v75
    %v77 = vmul.f32 %v64, 1.442695
    %v78 = vpow.pop %v77
    %v79 = vsel %vm38, %v66, 0.0
    %v80 = vsel %vm38, %v68, 0.0
    %v81 = vadd.f32 %v79, %v80
    %v82 = vsel %vm38, %v70, 0.0
    %v83 = vadd.f32 %v81, %v82
    %v84 = vsel %vm38, %v72, 0.0
    %v85 = vadd.f32 %v83, %v84
    %v86 = vsel %vm38, %v74, 0.0
    %v87 = vadd.f32 %v85, %v86
    %v88 = vsel %vm38, %v76, 0.0
    %v89 = vadd.f32 %v87, %v88
    %v90 = vsel %vm38, %v78, 0.0
    %v91 = vadd.f32 %v89, %v90
    %v92 = vrot.slane %v91, 4
    %v93 = vadd.f32 %v91, %v92
    %v94 = vrot.slane %v93, 2
    %v95 = vadd.f32 %v93, %v94
    %v96 = vrot.slane %v95, 1
    %v97 = vadd.f32 %v95, %v96
    %v98 = vlog2.pop %v97
    %v99 = vmul.f32 %v98, 0.6931472
    %v100 = vlaneseq
    %v101 = vshrl.u32 %v100, 7
    %v102 = vadd.s32 %v101, 8
    %v103 = vadd.s32 %v101, 16
    %v104 = vadd.s32 %v101, 24
    %v105 = vadd.s32 %v101, 32
    %v106 = vadd.s32 %v101, 40
    %v107 = vadd.s32 %v101, 48
    %v108 = vlaneseq
    %v109 = vshrl.u32 %v108, 7
    %v110 = vsub.s32 0, %v109
    %v111 = vrot.slane %v30, %v110
    %vm112 = vcmp.eq.s32.totalorder %v101, %v111
    %vm113 = vcmp.eq.s32.totalorder %v102, %v111
    %vm114 = vcmp.eq.s32.totalorder %v103, %v111
    %vm115 = vcmp.eq.s32.totalorder %v104, %v111
    %vm116 = vcmp.eq.s32.totalorder %v105, %v111
    %vm117 = vcmp.eq.s32.totalorder %v106, %v111
    %vm118 = vcmp.eq.s32.totalorder %v107, %v111
    %v119 = vsel %vm112, %v58, 0.0
    %v120 = vsel %vm113, %v59, 0.0
    %v121 = vsel %vm114, %v60, 0.0
    %v122 = vsel %vm115, %v61, 0.0
    %v123 = vsel %vm116, %v62, 0.0
    %v124 = vsel %vm117, %v63, 0.0
    %v125 = vsel %vm118, %v64, 0.0
    %v126 = vsel %vm38, %v119, 0.0
    %v127 = vsel %vm38, %v120, 0.0
    %v128 = vadd.f32 %v126, %v127
    %v129 = vsel %vm38, %v121, 0.0
    %v130 = vadd.f32 %v128, %v129
    %v131 = vsel %vm38, %v122, 0.0
    %v132 = vadd.f32 %v130, %v131
    %v133 = vsel %vm38, %v123, 0.0
    %v134 = vadd.f32 %v132, %v133
    %v135 = vsel %vm38, %v124, 0.0
    %v136 = vadd.f32 %v134, %v135
    %v137 = vsel %vm38, %v125, 0.0
    %v138 = vadd.f32 %v136, %v137
    %v139 = vrot.slane %v138, 4
    %v140 = vadd.f32 %v138, %v139
    %v141 = vrot.slane %v140, 2
    %v142 = vadd.f32 %v140, %v141
    %v143 = vrot.slane %v142, 1
    %v144 = vadd.f32 %v142, %v143
    %v145 = vsub.f32 %v99, %v144
    %v146 = vld [vmem:[%s1] sm:$0xff]
    %v147 = vld [vmem:[%s1 + $0x8] sm:$0x3]
    %v148 = vsel %vm38, %v146, -inf
    %vm149 = vcmask 156672
    %v150 = vsel %vm149, %v147, -inf
    %v151 = vmax.f32 %v148, %v150
    %v152 = vrot.slane %v151, 4
    %v153 = vmax.f32 %v151, %v152
    %v154 = vrot.slane %v153, 2
    %v155 = vmax.f32 %v153, %v154
    %v156 = vrot.slane %v155, 1
    %v157 = vmax.f32 %v155, %v156
    %v158 = vsub.f32 %v146, %v157
    %v159 = vsub.f32 %v147, %v157
    %v160 = vmul.f32 %v158, 1.442695
    %v161 = vpow.pop %v160
    %v162 = vmul.f32 %v159, 1.442695
    %v163 = vpow.pop %v162
    %v164 = vsel %vm38, %v161, 0.0
    %v165 = vsel %vm149, %v163, 0.0
    %v166 = vadd.f32 %v164, %v165
    %v167 = vrot.slane %v166, 4
    %v168 = vadd.f32 %v166, %v167
    %v169 = vrot.slane %v168, 2
    %v170 = vadd.f32 %v168, %v169
    %v171 = vrot.slane %v170, 1
    %v172 = vadd.f32 %v170, %v171
    %v173 = vlog2.pop %v172
    %v174 = vmul.f32 %v173, 0.6931472
    %v175 = vlaneseq
    %v176 = vshrl.u32 %v175, 7
    %v177 = vsub.s32 1, %v176
    %v178 = vrot.slane %v30, %v177
    %vm179 = vcmp.eq.s32.totalorder %v101, %v178
    %vm180 = vcmp.eq.s32.totalorder %v102, %v178
    %v181 = vsel %vm179, %v158, 0.0
    %v182 = vsel %vm180, %v159, 0.0
    %v183 = vsel %vm38, %v181, 0.0
    %v184 = vsel %vm149, %v182, 0.0
    %v185 = vadd.f32 %v183, %v184
    %v186 = vrot.slane %v185, 4
    %v187 = vadd.f32 %v185, %v186
    %v188 = vrot.slane %v187, 2
    %v189 = vadd.f32 %v187, %v188
    %v190 = vrot.slane %v189, 1
    %v191 = vadd.f32 %v189, %v190
    %v192 = vsub.f32 %v174, %v191
    %v193 = vadd.f32 %v145, %v192
    %v194 = vld [vmem:[%s2] sm:$0xff]
    %v195 = vld [vmem:[%s2 + $0x8] sm:$0x7f]
    %v196 = vsel %vm38, %v194, -inf
    %vm197 = vcmask 161792
    %v198 = vsel %vm197, %v195, -inf
    %v199 = vmax.f32 %v196, %v198
    %v200 = vrot.slane %v199, 4
    %v201 = vmax.f32 %v199, %v200
    %v202 = vrot.slane %v201, 2
    %v203 = vmax.f32 %v201, %v202
    %v204 = vrot.slane %v203, 1
    %v205 = vmax.f32 %v203, %v204
    %v206 = vsub.f32 %v194, %v205
    %v207 = vsub.f32 %v195, %v205
    %v208 = vmul.f32 %v206, 1.442695
    %v209 = vpow.pop %v208
    %v210 = vmul.f32 %v207, 1.442695
    %v211 = vpow.pop %v210
    %v212 = vsel %vm38, %v209, 0.0
    %v213 = vsel %vm197, %v211, 0.0
    %v214 = vadd.f32 %v212, %v213
    %v215 = vrot.slane %v214, 4
    %v216 = vadd.f32 %v214, %v215
    %v217 = vrot.slane %v216, 2
    %v218 = vadd.f32 %v216, %v217
    %v219 = vrot.slane %v218, 1
    %v220 = vadd.f32 %v218, %v219
    %v221 = vlog2.pop %v220
    %v222 = vmul.f32 %v221, 0.6931472
    %v223 = vlaneseq
    %v224 = vshrl.u32 %v223, 7
    %v225 = vsub.s32 2, %v224
    %v226 = vrot.slane %v30, %v225
    %vm227 = vcmp.eq.s32.totalorder %v101, %v226
    %vm228 = vcmp.eq.s32.totalorder %v102, %v226
    %v229 = vsel %vm227, %v206, 0.0
    %v230 = vsel %vm228, %v207, 0.0
    %v231 = vsel %vm38, %v229, 0.0
    %v232 = vsel %vm197, %v230, 0.0
    %v233 = vadd.f32 %v231, %v232
    %v234 = vrot.slane %v233, 4
    %v235 = vadd.f32 %v233, %v234
    %v236 = vrot.slane %v235, 2
    %v237 = vadd.f32 %v235, %v236
    %v238 = vrot.slane %v237, 1
    %v239 = vadd.f32 %v237, %v238
    %v240 = vsub.f32 %v222, %v239
    %v241 = vadd.f32 %v193, %v240
    %v242 = vld [vmem:[#allocation2] sm:$0x1]
    %v243 = vsel %vm29, %v241, 0.0
    %v244 = vadd.f32 %v242, %v243
    %vm245 = vcmask 155648
    %246 = vst.msk [vmem:[#allocation2] sm:$0x1] %vm245, %v244
    // Predicated region
    $region22: #{multi_task_loss_three_tasks.1} parent=1 // pred_check
      %p247 = pneg %p18
    $region23: #{multi_task_loss_three_tasks.1} parent=1 // pred_check_branch
      %249 = sbr.rel (%p247) target = $region25
    $region24: #{multi_task_loss_three_tasks.1} parent=1 // pred_region
      %v250 = vld [vmem:[#allocation2] sm:$0x1]
      %v251 = vsel %vm245, %v250, 0.0
      %252 = vadd.xlane.f32.xlu0 %v251
      %v253 = vpop.xlane.xlu0 %252
      %v254 = vrot.slane %v253, 4
      %v255 = vadd.f32 %v253, %v254
      %v256 = vrot.slane %v255, 2
      %v257 = vadd.f32 %v255, %v256
      %v258 = vrot.slane %v257, 1
      %v259 = vadd.f32 %v257, %v258
      %s260 = vtos %v259
      %s261 = smul.f32 %s260, 0.05
      %s262 = scalar_lea.smem [#allocation3], 0
      %263 = sst [smem:[%s262]] %s261
    $region25: #{multi_task_loss_three_tasks.1} parent=1 // pred_fallthru
      _
    // Predicated region
    $region26: #{multi_task_loss_three_tasks.1} parent=1 // pred_check
      _
    $region27: #{multi_task_loss_three_tasks.1} parent=1 // pred_check_branch
      %265 = sbr.rel (0) target = $region29
    $region28: #{multi_task_loss_three_tasks.1} parent=1 // pred_region
      %s267 = ssub.s32 16, 16
      %268 = vsyncadd [#allocation4], %s267
      %271 = dma.smem_to_hbm [#allocation3], 16, %s4, [#allocation4]
    $region29: #{multi_task_loss_three_tasks.1} parent=1 // pred_fallthru
      _
    // Predicated region
    $region30: #{multi_task_loss_three_tasks.1} parent=1 // pred_check
      _
    $region31: #{multi_task_loss_three_tasks.1} parent=1 // pred_check_branch
      %273 = sbr.rel (0) target = $region33
    $region32: #{multi_task_loss_three_tasks.1} parent=1 // pred_region
      %274 = dma.done [#allocation4], 16
    $region33: #{multi_task_loss_three_tasks.1} parent=1 // pred_fallthru
      _
    %275 = sfence
    %276 = vsyncpa [#allocation4], 1

</llo_original>
